<compile_context>
chip_gen: v6e
topology: v6e:2x2x1
jax: 0.10.0
libtpu: 0.0.40
codegen_flags: <defaults>
</compile_context>

<pallas_src>
import jax
import jax.numpy as jnp
from jax.experimental import pallas as pl
from jax.experimental.pallas import tpu as pltpu

LANE = 128      # vreg lane width
SUBLANE = 8     # vreg sublane count (f32)


def _round_up(n, m):
    return ((n + m - 1) // m) * m


def _cdiv(a, b):
    return (a + b - 1) // b


def _pad2(x, rows, cols):
    r, c = x.shape
    return jnp.pad(x, ((0, rows - r), (0, cols - c)))


# ----------------------------------------------------------------------------
# Kernel
# ----------------------------------------------------------------------------
def mlp_actor_kernel(act_limit_ref,
                     obs_ref, w1_ref, b1_ref, w2_ref, b2_ref, w3_ref, b3_ref,
                     out_ref):
    """One batch tile: three chained matmuls, intermediates live in vregs."""
    # obs tile [tb, obs_dim] f32 -> bf16 once for the MXU.
    x = obs_ref[...].astype(w1_ref.dtype)

    # Layer 1: bf16 MXU matmul, f32 accumulate; bias-add + ReLU in f32;
    # carry the activation as bf16 (halves register/VMEM pressure).
    h1 = jnp.dot(x, w1_ref[...], preferred_element_type=jnp.float32) + b1_ref[...]
    h1 = jnp.maximum(h1, 0.0).astype(w2_ref.dtype)

    # Layer 2.
    h2 = jnp.dot(h1, w2_ref[...], preferred_element_type=jnp.float32) + b2_ref[...]
    h2 = jnp.maximum(h2, 0.0).astype(w3_ref.dtype)

    # Output layer: Linear + bias + Tanh, scaled by runtime act_limit (SMEM).
    y = jnp.dot(h2, w3_ref[...], preferred_element_type=jnp.float32) + b3_ref[...]
    out_ref[...] = (act_limit_ref[0] * jnp.tanh(y)).astype(out_ref.dtype)


# ----------------------------------------------------------------------------
# Parameter preparation (hoisted out of the per-call path)
# ----------------------------------------------------------------------------
def prepare_params(params, weight_dtype=jnp.bfloat16):
    """Pad hidden dims to 128 lanes and cast weights to bf16, once.

    Input (obs_dim) and output (act_dim) feature dims stay unpadded: obs
    streams its real lane width and the output block uses the full act_dim.
    Zero padding on hidden dims keeps the math exact.
    """
    (w1, b1), (w2, b2), (w3, b3) = params
    obs_dim, h1_dim = w1.shape
    h2_dim, act_dim = w2.shape[1], w3.shape[1]
    h1_p = _round_up(h1_dim, LANE)
    h2_p = _round_up(h2_dim, LANE)

    w1p = _pad2(w1, obs_dim, h1_p).astype(weight_dtype)
    b1p = _pad2(b1, 1, h1_p).astype(jnp.float32)
    w2p = _pad2(w2, h1_p, h2_p).astype(weight_dtype)
    b2p = _pad2(b2, 1, h2_p).astype(jnp.float32)
    w3p = _pad2(w3, h2_p, act_dim).astype(weight_dtype)
    b3p = _pad2(b3, 1, act_dim).astype(jnp.float32)
    return ((w1p, b1p), (w2p, b2p), (w3p, b3p))


# ----------------------------------------------------------------------------
# Forward wrapper
# ----------------------------------------------------------------------------
_SINGLE_BUFFER_WEIGHTS = None  # probed once: does this jax accept pl.Buffered(1)?


def _resident_spec(shape, single_buffer):
    """Weights/biases stay resident in VMEM across all batch tiles."""
    if single_buffer:
        # Constant-index blocks need no double buffering.
        return pl.BlockSpec(shape, lambda i: (0, 0), pipeline_mode=pl.Buffered(1))
    return pl.BlockSpec(shape, lambda i: (0, 0))


def _run(act_limit_arr, obs_pad, prepared_params, tb, grid, act_dim,
         single_buffer):
    (w1p, b1p), (w2p, b2p), (w3p, b3p) = prepared_params
    batch_p, obs_dim = obs_pad.shape
    return pl.pallas_call(
        mlp_actor_kernel,
        out_shape=jax.ShapeDtypeStruct((batch_p, act_dim), jnp.float32),
        grid=grid,
        in_specs=[
            pl.BlockSpec(memory_space=pltpu.MemorySpace.SMEM),   # act_limit
            pl.BlockSpec((tb, obs_dim), lambda i: (i, 0)),       # obs tile
            _resident_spec(w1p.shape, single_buffer),
            _resident_spec(b1p.shape, single_buffer),
            _resident_spec(w2p.shape, single_buffer),
            _resident_spec(b2p.shape, single_buffer),
            _resident_spec(w3p.shape, single_buffer),
            _resident_spec(b3p.shape, single_buffer),
        ],
        out_specs=pl.BlockSpec((tb, act_dim), lambda i: (i, 0)),
        compiler_params=pltpu.CompilerParams(
            dimension_semantics=("parallel",)),  # shards batch tiles on v7x
    )(act_limit_arr, obs_pad, w1p, b1p, w2p, b2p, w3p, b3p)


def mlp_actor_forward(obs, prepared_params, act_limit, *, batch_tile=512):
    """Batch-pad obs, run the batch-tiled fused kernel, slice the batch dim."""
    (w1p, _), _, (w3p, _) = prepared_params
    batch, obs_dim = obs.shape
    assert obs_dim == w1p.shape[0], "obs feature dim mismatch with params"
    act_dim = w3p.shape[1]

    # Batch tile: multiple of 8 (sublane divisibility), default 512 (amortizes
    # per-grid-step pipeline overhead). When there is enough work, cap the tile
    # so the grid has >= 2 steps (engages both v7x TensorCores via "parallel").
    tb_cap = max(SUBLANE, _round_up(batch_tile, SUBLANE))
    batch_aligned = _round_up(batch, SUBLANE)
    if batch_aligned >= 2 * SUBLANE:
        tb = min(tb_cap, _round_up(_cdiv(batch_aligned, 2), SUBLANE))
    else:
        tb = min(tb_cap, batch_aligned)
    batch_p = _round_up(batch_aligned, tb)
    grid = (batch_p // tb,)

    # Only the batch dim is padded; obs streams at its true lane width.
    obs_pad = jnp.pad(obs.astype(jnp.float32), ((0, batch_p - batch), (0, 0)))
    act_limit_arr = jnp.asarray([act_limit], dtype=jnp.float32)

    global _SINGLE_BUFFER_WEIGHTS
    if _SINGLE_BUFFER_WEIGHTS is None and not hasattr(pl, "Buffered"):
        _SINGLE_BUFFER_WEIGHTS = False
    attempts = ((True, False) if _SINGLE_BUFFER_WEIGHTS is None
                else (_SINGLE_BUFFER_WEIGHTS,))

    out_padded = None
    for idx, single_buffer in enumerate(attempts):
        try:
            out_padded = _run(act_limit_arr, obs_pad, prepared_params,
                              tb, grid, act_dim, single_buffer)
            _SINGLE_BUFFER_WEIGHTS = single_buffer
            break
        except Exception:
            # Fall back to default (double-buffered) resident specs if this
            # JAX build rejects pipeline_mode=pl.Buffered(1).
            if idx == len(attempts) - 1:
                raise
    return out_padded[:batch]


# ----------------------------------------------------------------------------
# Parameter init + pure-JAX reference
# ----------------------------------------------------------------------------
def init_params(key, obs_dim, hidden_sizes, act_dim):
    """Deterministic synthetic f32 parameters (shapes follow nn.Linear)."""
    sizes = [obs_dim] + list(hidden_sizes) + [act_dim]
    params = []
    for i in range(len(sizes) - 1):
        key, kw, kb = jax.random.split(key, 3)
        bound = 1.0 / float(sizes[i]) ** 0.5
        # Stored as [in, out] (transpose of PyTorch's [out, in]).
        w = jax.random.uniform(kw, (sizes[i], sizes[i + 1]),
                               minval=-bound, maxval=bound, dtype=jnp.float32)
        b = jax.random.uniform(kb, (1, sizes[i + 1]),
                               minval=-bound, maxval=bound, dtype=jnp.float32)
        params.append((w, b))
    return params


def reference_forward(obs, params, act_limit, weight_dtype=jnp.bfloat16):
    """Pure-JAX reference emulating bf16 MXU inputs with f32 accumulation."""
    def layer(x, w, b):
        xw = jnp.dot(x.astype(weight_dtype).astype(jnp.float32),
                     w.astype(weight_dtype).astype(jnp.float32),
                     preferred_element_type=jnp.float32)
        return xw + b

    (w1, b1), (w2, b2), (w3, b3) = params
    h = jnp.maximum(layer(obs, w1, b1), 0.0)
    h = jnp.maximum(layer(h, w2, b2), 0.0)
    return act_limit * jnp.tanh(layer(h, w3, b3))


if __name__ == "__main__":
    obs_dim, act_dim = 16, 8
    hidden_sizes = (32, 32)
    act_limit = 2.0

    key = jax.random.PRNGKey(0)
    key, kobs_small, kobs_big = jax.random.split(key, 3)
    params = init_params(key, obs_dim, hidden_sizes, act_dim)
    prepared = prepare_params(params)       # pad + bf16-cast once (hoisted)

    # Small batch (typical single-step actor call): single 8-row tile.
    obs = jax.random.normal(kobs_small, (2, obs_dim), dtype=jnp.float32)
    out = jax.block_until_ready(mlp_actor_forward(obs, prepared, act_limit))
    ref = reference_forward(obs, params, act_limit)
    assert out.shape == (2, act_dim)
    assert jnp.allclose(out, ref, atol=1e-4, rtol=1e-4), float(
        jnp.max(jnp.abs(out - ref)))

    # Larger batch: exercises the >=2-step parallel batch grid + pad/slice path.
    obs_big = jax.random.normal(kobs_big, (200, obs_dim), dtype=jnp.float32)
    out_big = jax.block_until_ready(
        mlp_actor_forward(obs_big, prepared, act_limit))
    ref_big = reference_forward(obs_big, params, act_limit)
    assert out_big.shape == (200, act_dim)
    assert jnp.allclose(out_big, ref_big, atol=1e-4, rtol=1e-4), float(
        jnp.max(jnp.abs(out_big - ref_big)))

    print("KERNEL_OK")
</pallas_src>

<mosaic_0001>
module attributes {stable_mosaic.version = 11 : i64} {
  func.func @mlp_actor_kernel(%arg0: i32, %arg1: memref<1xf32, #tpu.memory_space<smem>>, %arg2: memref<8x16xf32, #tpu.memory_space<vmem>>, %arg3: memref<16x128xbf16, #tpu.memory_space<vmem>>, %arg4: memref<1x128xf32, #tpu.memory_space<vmem>>, %arg5: memref<128x128xbf16, #tpu.memory_space<vmem>>, %arg6: memref<1x128xf32, #tpu.memory_space<vmem>>, %arg7: memref<128x8xbf16, #tpu.memory_space<vmem>>, %arg8: memref<1x8xf32, #tpu.memory_space<vmem>>, %arg9: memref<8x8xf32, #tpu.memory_space<vmem>>) attributes {dimension_semantics = [#tpu.dimension_semantics<parallel>], iteration_bounds = array<i64: 1>, scalar_prefetch = 0 : i64, scratch_operands = 0 : i64, tpu.core_type = #tpu.core_type<tc>, window_params = [{transform_indices = @transform_0, window_bounds = array<i64: 1>}, {transform_indices = @transform_1, window_bounds = array<i64: 8, 16>}, {pipeline_mode = #tpu.pipeline_mode<synchronous>, transform_indices = @transform_2, window_bounds = array<i64: 16, 128>}, {pipeline_mode = #tpu.pipeline_mode<synchronous>, transform_indices = @transform_3, window_bounds = array<i64: 1, 128>}, {pipeline_mode = #tpu.pipeline_mode<synchronous>, transform_indices = @transform_4, window_bounds = array<i64: 128, 128>}, {pipeline_mode = #tpu.pipeline_mode<synchronous>, transform_indices = @transform_5, window_bounds = array<i64: 1, 128>}, {pipeline_mode = #tpu.pipeline_mode<synchronous>, transform_indices = @transform_6, window_bounds = array<i64: 128, 8>}, {pipeline_mode = #tpu.pipeline_mode<synchronous>, transform_indices = @transform_7, window_bounds = array<i64: 1, 8>}, {transform_indices = @transform_8, window_bounds = array<i64: 8, 8>}]} {
    %c0 = arith.constant 0 : index
    %c0_0 = arith.constant 0 : index
    %0 = vector.load %arg2[%c0, %c0_0] : memref<8x16xf32, #tpu.memory_space<vmem>>, vector<8x16xf32>
    %1 = arith.truncf %0 : vector<8x16xf32> to vector<8x16xbf16>
    %c0_1 = arith.constant 0 : index
    %c0_2 = arith.constant 0 : index
    %2 = vector.load %arg3[%c0_1, %c0_2] : memref<16x128xbf16, #tpu.memory_space<vmem>>, vector<16x128xbf16>
    %cst = arith.constant dense<0.000000e+00> : vector<8x128xf32>
    %3 = tpu.matmul %1, %2, %cst {dimension_numbers = #tpu.dot_dimension_numbers<[1], [0], [0], [1], [0, 0, 1, 1], [], []>} : vector<8x16xbf16>, vector<16x128xbf16>, vector<8x128xf32> -> vector<8x128xf32>
    %c0_3 = arith.constant 0 : index
    %c0_4 = arith.constant 0 : index
    %4 = vector.load %arg4[%c0_3, %c0_4] : memref<1x128xf32, #tpu.memory_space<vmem>>, vector<1x128xf32>
    %5 = vector.broadcast %4 : vector<1x128xf32> to vector<8x128xf32>
    %6 = arith.addf %3, %5 : vector<8x128xf32>
    %cst_5 = arith.constant 0.000000e+00 : f32
    %7 = vector.broadcast %cst_5 : f32 to vector<8x128xf32>
    %8 = arith.maximumf %6, %7 : vector<8x128xf32>
    %9 = arith.truncf %8 : vector<8x128xf32> to vector<8x128xbf16>
    %c0_6 = arith.constant 0 : index
    %c0_7 = arith.constant 0 : index
    %10 = vector.load %arg5[%c0_6, %c0_7] : memref<128x128xbf16, #tpu.memory_space<vmem>>, vector<128x128xbf16>
    %cst_8 = arith.constant dense<0.000000e+00> : vector<8x128xf32>
    %11 = tpu.matmul %9, %10, %cst_8 {dimension_numbers = #tpu.dot_dimension_numbers<[1], [0], [0], [1], [0, 0, 1, 1], [], []>} : vector<8x128xbf16>, vector<128x128xbf16>, vector<8x128xf32> -> vector<8x128xf32>
    %c0_9 = arith.constant 0 : index
    %c0_10 = arith.constant 0 : index
    %12 = vector.load %arg6[%c0_9, %c0_10] : memref<1x128xf32, #tpu.memory_space<vmem>>, vector<1x128xf32>
    %13 = vector.broadcast %12 : vector<1x128xf32> to vector<8x128xf32>
    %14 = arith.addf %11, %13 : vector<8x128xf32>
    %cst_11 = arith.constant 0.000000e+00 : f32
    %15 = vector.broadcast %cst_11 : f32 to vector<8x128xf32>
    %16 = arith.maximumf %14, %15 : vector<8x128xf32>
    %17 = arith.truncf %16 : vector<8x128xf32> to vector<8x128xbf16>
    %c0_12 = arith.constant 0 : index
    %c0_13 = arith.constant 0 : index
    %18 = vector.load %arg7[%c0_12, %c0_13] : memref<128x8xbf16, #tpu.memory_space<vmem>>, vector<128x8xbf16>
    %cst_14 = arith.constant dense<0.000000e+00> : vector<8x8xf32>
    %19 = tpu.matmul %17, %18, %cst_14 {dimension_numbers = #tpu.dot_dimension_numbers<[1], [0], [0], [1], [0, 0, 1, 1], [], []>} : vector<8x128xbf16>, vector<128x8xbf16>, vector<8x8xf32> -> vector<8x8xf32>
    %c0_15 = arith.constant 0 : index
    %c0_16 = arith.constant 0 : index
    %20 = vector.load %arg8[%c0_15, %c0_16] : memref<1x8xf32, #tpu.memory_space<vmem>>, vector<1x8xf32>
    %21 = vector.broadcast %20 : vector<1x8xf32> to vector<8x8xf32>
    %22 = arith.addf %19, %21 : vector<8x8xf32>
    %c0_17 = arith.constant 0 : index
    %23 = memref.load %arg1[%c0_17] : memref<1xf32, #tpu.memory_space<smem>>
    %24 = math.tanh %22 : vector<8x8xf32>
    %25 = vector.broadcast %23 : f32 to vector<8x8xf32>
    %26 = arith.mulf %25, %24 : vector<8x8xf32>
    %c0_18 = arith.constant 0 : index
    %c0_19 = arith.constant 0 : index
    %27 = vector.load %arg9[%c0_18, %c0_19] : memref<8x8xf32, #tpu.memory_space<vmem>>, vector<8x8xf32>
    tpu.vector_store %arg9[%c0_18, %c0_19], %26 {strides = array<i32>} : memref<8x8xf32, #tpu.memory_space<vmem>>, vector<8x8xf32>,
    return
  }
  func.func @transform_0(%arg0: i32) -> i32 {
    %c0_i32 = arith.constant 0 : i32
    %c0_i32_0 = arith.constant 0 : i32
    return %c0_i32 : i32
  }
  func.func @transform_1(%arg0: i32) -> (i32, i32) {
    %c0_i32 = arith.constant 0 : i32
    %c0_i32_0 = arith.constant 0 : i32
    return %arg0, %c0_i32 : i32, i32
  }
  func.func @transform_2(%arg0: i32) -> (i32, i32) {
    %c0_i32 = arith.constant 0 : i32
    %c0_i32_0 = arith.constant 0 : i32
    %c0_i32_1 = arith.constant 0 : i32
    return %c0_i32, %c0_i32_0 : i32, i32
  }
  func.func @transform_3(%arg0: i32) -> (i32, i32) {
    %c0_i32 = arith.constant 0 : i32
    %c0_i32_0 = arith.constant 0 : i32
    %c0_i32_1 = arith.constant 0 : i32
    return %c0_i32, %c0_i32_0 : i32, i32
  }
  func.func @transform_4(%arg0: i32) -> (i32, i32) {
    %c0_i32 = arith.constant 0 : i32
    %c0_i32_0 = arith.constant 0 : i32
    %c0_i32_1 = arith.constant 0 : i32
    return %c0_i32, %c0_i32_0 : i32, i32
  }
  func.func @transform_5(%arg0: i32) -> (i32, i32) {
    %c0_i32 = arith.constant 0 : i32
    %c0_i32_0 = arith.constant 0 : i32
    %c0_i32_1 = arith.constant 0 : i32
    return %c0_i32, %c0_i32_0 : i32, i32
  }
  func.func @transform_6(%arg0: i32) -> (i32, i32) {
    %c0_i32 = arith.constant 0 : i32
    %c0_i32_0 = arith.constant 0 : i32
    %c0_i32_1 = arith.constant 0 : i32
    return %c0_i32, %c0_i32_0 : i32, i32
  }
  func.func @transform_7(%arg0: i32) -> (i32, i32) {
    %c0_i32 = arith.constant 0 : i32
    %c0_i32_0 = arith.constant 0 : i32
    %c0_i32_1 = arith.constant 0 : i32
    return %c0_i32, %c0_i32_0 : i32, i32
  }
  func.func @transform_8(%arg0: i32) -> (i32, i32) {
    %c0_i32 = arith.constant 0 : i32
    %c0_i32_0 = arith.constant 0 : i32
    return %arg0, %c0_i32 : i32, i32
  }
}

module attributes {stable_mosaic.version = 11 : i64} {
  func.func @mlp_actor_kernel(%arg0: i32, %arg1: memref<1xf32, #tpu.memory_space<smem>>, %arg2: memref<8x16xf32, #tpu.memory_space<vmem>>, %arg3: memref<16x128xbf16, #tpu.memory_space<vmem>>, %arg4: memref<1x128xf32, #tpu.memory_space<vmem>>, %arg5: memref<128x128xbf16, #tpu.memory_space<vmem>>, %arg6: memref<1x128xf32, #tpu.memory_space<vmem>>, %arg7: memref<128x8xbf16, #tpu.memory_space<vmem>>, %arg8: memref<1x8xf32, #tpu.memory_space<vmem>>, %arg9: memref<8x8xf32, #tpu.memory_space<vmem>>) attributes {dimension_semantics = [#tpu.dimension_semantics<parallel>], iteration_bounds = array<i64: 1>, scalar_prefetch = 0 : i64, scratch_operands = 0 : i64, tpu.core_type = #tpu.core_type<tc>, window_params = [{transform_indices = @transform_0, window_bounds = array<i64: 1>}, {transform_indices = @transform_1, window_bounds = array<i64: 8, 16>}, {pipeline_mode = #tpu.pipeline_mode<synchronous>, transform_indices = @transform_2, window_bounds = array<i64: 16, 128>}, {pipeline_mode = #tpu.pipeline_mode<synchronous>, transform_indices = @transform_3, window_bounds = array<i64: 1, 128>}, {pipeline_mode = #tpu.pipeline_mode<synchronous>, transform_indices = @transform_4, window_bounds = array<i64: 128, 128>}, {pipeline_mode = #tpu.pipeline_mode<synchronous>, transform_indices = @transform_5, window_bounds = array<i64: 1, 128>}, {pipeline_mode = #tpu.pipeline_mode<synchronous>, transform_indices = @transform_6, window_bounds = array<i64: 128, 8>}, {pipeline_mode = #tpu.pipeline_mode<synchronous>, transform_indices = @transform_7, window_bounds = array<i64: 1, 8>}, {transform_indices = @transform_8, window_bounds = array<i64: 8, 8>}]} {
    %c0 = arith.constant 0 : index
    %c0_0 = arith.constant 0 : index
    %0 = vector.load %arg2[%c0, %c0_0] : memref<8x16xf32, #tpu.memory_space<vmem>>, vector<8x16xf32>
    %1 = arith.truncf %0 : vector<8x16xf32> to vector<8x16xbf16>
    %c0_1 = arith.constant 0 : index
    %c0_2 = arith.constant 0 : index
    %2 = vector.load %arg3[%c0_1, %c0_2] : memref<16x128xbf16, #tpu.memory_space<vmem>>, vector<16x128xbf16>
    %cst = arith.constant dense<0.000000e+00> : vector<8x128xf32>
    %3 = tpu.matmul %1, %2, %cst {dimension_numbers = #tpu.dot_dimension_numbers<[1], [0], [0], [1], [0, 0, 1, 1], [], []>} : vector<8x16xbf16>, vector<16x128xbf16>, vector<8x128xf32> -> vector<8x128xf32>
    %c0_3 = arith.constant 0 : index
    %c0_4 = arith.constant 0 : index
    %4 = vector.load %arg4[%c0_3, %c0_4] : memref<1x128xf32, #tpu.memory_space<vmem>>, vector<1x128xf32>
    %5 = vector.broadcast %4 : vector<1x128xf32> to vector<8x128xf32>
    %6 = arith.addf %3, %5 : vector<8x128xf32>
    %cst_5 = arith.constant 0.000000e+00 : f32
    %7 = vector.broadcast %cst_5 : f32 to vector<8x128xf32>
    %8 = arith.maximumf %6, %7 : vector<8x128xf32>
    %9 = arith.truncf %8 : vector<8x128xf32> to vector<8x128xbf16>
    %c0_6 = arith.constant 0 : index
    %c0_7 = arith.constant 0 : index
    %10 = vector.load %arg5[%c0_6, %c0_7] : memref<128x128xbf16, #tpu.memory_space<vmem>>, vector<128x128xbf16>
    %cst_8 = arith.constant dense<0.000000e+00> : vector<8x128xf32>
    %11 = tpu.matmul %9, %10, %cst_8 {dimension_numbers = #tpu.dot_dimension_numbers<[1], [0], [0], [1], [0, 0, 1, 1], [], []>} : vector<8x128xbf16>, vector<128x128xbf16>, vector<8x128xf32> -> vector<8x128xf32>
    %c0_9 = arith.constant 0 : index
    %c0_10 = arith.constant 0 : index
    %12 = vector.load %arg6[%c0_9, %c0_10] : memref<1x128xf32, #tpu.memory_space<vmem>>, vector<1x128xf32>
    %13 = vector.broadcast %12 : vector<1x128xf32> to vector<8x128xf32>
    %14 = arith.addf %11, %13 : vector<8x128xf32>
    %cst_11 = arith.constant 0.000000e+00 : f32
    %15 = vector.broadcast %cst_11 : f32 to vector<8x128xf32>
    %16 = arith.maximumf %14, %15 : vector<8x128xf32>
    %17 = arith.truncf %16 : vector<8x128xf32> to vector<8x128xbf16>
    %c0_12 = arith.constant 0 : index
    %c0_13 = arith.constant 0 : index
    %18 = vector.load %arg7[%c0_12, %c0_13] : memref<128x8xbf16, #tpu.memory_space<vmem>>, vector<128x8xbf16>
    %cst_14 = arith.constant dense<0.000000e+00> : vector<8x8xf32>
    %19 = tpu.matmul %17, %18, %cst_14 {dimension_numbers = #tpu.dot_dimension_numbers<[1], [0], [0], [1], [0, 0, 1, 1], [], []>} : vector<8x128xbf16>, vector<128x8xbf16>, vector<8x8xf32> -> vector<8x8xf32>
    %c0_15 = arith.constant 0 : index
    %c0_16 = arith.constant 0 : index
    %20 = vector.load %arg8[%c0_15, %c0_16] : memref<1x8xf32, #tpu.memory_space<vmem>>, vector<1x8xf32>
    %21 = vector.broadcast %20 : vector<1x8xf32> to vector<8x8xf32>
    %22 = arith.addf %19, %21 : vector<8x8xf32>
    %c0_17 = arith.constant 0 : index
    %23 = memref.load %arg1[%c0_17] : memref<1xf32, #tpu.memory_space<smem>>
    %24 = math.tanh %22 : vector<8x8xf32>
    %25 = vector.broadcast %23 : f32 to vector<8x8xf32>
    %26 = arith.mulf %25, %24 : vector<8x8xf32>
    %c0_18 = arith.constant 0 : index
    %c0_19 = arith.constant 0 : index
    %27 = vector.load %arg9[%c0_18, %c0_19] : memref<8x8xf32, #tpu.memory_space<vmem>>, vector<8x8xf32>
    tpu.vector_store %arg9[%c0_18, %c0_19], %26 {strides = array<i32>} : memref<8x8xf32, #tpu.memory_space<vmem>>, vector<8x8xf32>,
    return
  }
  func.func @transform_0(%arg0: i32) -> i32 {
    %c0_i32 = arith.constant 0 : i32
    %c0_i32_0 = arith.constant 0 : i32
    return %c0_i32 : i32
  }
  func.func @transform_1(%arg0: i32) -> (i32, i32) {
    %c0_i32 = arith.constant 0 : i32
    %c0_i32_0 = arith.constant 0 : i32
    return %arg0, %c0_i32 : i32, i32
  }
  func.func @transform_2(%arg0: i32) -> (i32, i32) {
    %c0_i32 = arith.constant 0 : i32
    %c0_i32_0 = arith.constant 0 : i32
    %c0_i32_1 = arith.constant 0 : i32
    return %c0_i32, %c0_i32_0 : i32, i32
  }
  func.func @transform_3(%arg0: i32) -> (i32, i32) {
    %c0_i32 = arith.constant 0 : i32
    %c0_i32_0 = arith.constant 0 : i32
    %c0_i32_1 = arith.constant 0 : i32
    return %c0_i32, %c0_i32_0 : i32, i32
  }
  func.func @transform_4(%arg0: i32) -> (i32, i32) {
    %c0_i32 = arith.constant 0 : i32
    %c0_i32_0 = arith.constant 0 : i32
    %c0_i32_1 = arith.constant 0 : i32
    return %c0_i32, %c0_i32_0 : i32, i32
  }
  func.func @transform_5(%arg0: i32) -> (i32, i32) {
    %c0_i32 = arith.constant 0 : i32
    %c0_i32_0 = arith.constant 0 : i32
    %c0_i32_1 = arith.constant 0 : i32
    return %c0_i32, %c0_i32_0 : i32, i32
  }
  func.func @transform_6(%arg0: i32) -> (i32, i32) {
    %c0_i32 = arith.constant 0 : i32
    %c0_i32_0 = arith.constant 0 : i32
    %c0_i32_1 = arith.constant 0 : i32
    return %c0_i32, %c0_i32_0 : i32, i32
  }
  func.func @transform_7(%arg0: i32) -> (i32, i32) {
    %c0_i32 = arith.constant 0 : i32
    %c0_i32_0 = arith.constant 0 : i32
    %c0_i32_1 = arith.constant 0 : i32
    return %c0_i32, %c0_i32_0 : i32, i32
  }
  func.func @transform_8(%arg0: i32) -> (i32, i32) {
    %c0_i32 = arith.constant 0 : i32
    %c0_i32_0 = arith.constant 0 : i32
    return %arg0, %c0_i32 : i32, i32
  }
}

</mosaic_0001>

<llo_original>
// kernel: tpu_custom_call.1
$region0: #{tpu_custom_call.1}
  #allocation0 [shape = 'u32[]', space=smem, size = 0x4, offset = 0x4, fixed_abs, tag = 'smem constant byte address 0x4 - core index']
  #allocation1 [shape = 'u32[144,128]{1,0:T(1,128)}', space=vmem, size = 0x12000, scoped, tag = 'internal scratch']
  #allocation2 [shape = 'f32[1]{0:T(128)S(6)}', space=smem, size = 0x200, scoped, tag = 'scoped memory for tpu_custom_call.1']
  %s0 = inlined_call_operand.<no memory space> [shape: f32[1], index: 0, kind: input, shape index: {}]
  %s1 = inlined_call_operand.vmem [shape: f32[8,16], index: 1, kind: input, shape index: {}]
  %s2 = inlined_call_operand.hbm [shape: bf16[16,128], index: 2, kind: input, shape index: {}]
  %s3 = inlined_call_operand.vmem [shape: f32[1,128], index: 3, kind: input, shape index: {}]
  %s4 = inlined_call_operand.vmem [shape: bf16[128,128], index: 4, kind: input, shape index: {}]
  %s5 = inlined_call_operand.hbm [shape: f32[1,128], index: 5, kind: input, shape index: {}]
  %s6 = inlined_call_operand.vmem [shape: bf16[128,8], index: 6, kind: input, shape index: {}]
  %s7 = inlined_call_operand.vmem [shape: f32[1,8], index: 7, kind: input, shape index: {}]
  %s8 = inlined_call_operand.hbm [shape: f32[8,8], index: 8, kind: output, shape index: {}]
  %s9 = sld [smem:[#allocation0]]
  $region50: #{tpu_custom_call.1} parent=0
    _
  %s11 = ssub.s32 1, %s9
  %s12 = scalar_select 0, %s11, %s9
  %13 = sst [smem:[#allocation2]] %s0
  $region1: #{tpu_custom_call.1} parent=0
    #allocation3 [shape = 'u8[4096]{0}', space=vmem, size = 0x1000, scoped, tag = 'input window, operand 2, single buffered']
    #allocation4 [shape = 's32[1]{0}', space=sflag, size = 0x4, scoped, tag = 'scoped memory for tpu_custom_call.1']
    #allocation5 [shape = 's32[1]{0}', space=sflag, size = 0x4, scoped, tag = 'scoped memory for tpu_custom_call.1']
    #allocation6 [shape = 'u8[512]{0}', space=vmem, size = 0x400, scoped, tag = 'input window, operand 5, single buffered']
    #allocation7 [shape = 's32[1]{0}', space=sflag, size = 0x4, scoped, tag = 'scoped memory for tpu_custom_call.1']
    #allocation8 [shape = 'u8[4096]{0}', space=vmem, size = 0x1000, scoped, tag = 'output window, operand 0, single buffered']
    %14 = vsyncpa [#allocation4], 0
    %15 = vsyncpa [#allocation7], 0
    %16 = vsyncpa [#allocation5], 0
    // Predicated region
    $region2: #{tpu_custom_call.1} parent=1 // pred_check
      _
    $region3: #{tpu_custom_call.1} parent=1 // pred_check_branch
      %18 = sbr.rel (0) target = $region5
    $region4: #{tpu_custom_call.1} parent=1 // pred_region
      _
    $region5: #{tpu_custom_call.1} parent=1 // pred_fallthru
      _
    // Predicated region
    $region6: #{tpu_custom_call.1} parent=1 // pred_check
      _
    $region7: #{tpu_custom_call.1} parent=1 // pred_check_branch
      %20 = sbr.rel (0) target = $region9
    $region8: #{tpu_custom_call.1} parent=1 // pred_region
      _
    $region9: #{tpu_custom_call.1} parent=1 // pred_fallthru
      _
    // Predicated region
    $region10: #{tpu_custom_call.1} parent=1 // pred_check
      _
    $region11: #{tpu_custom_call.1} parent=1 // pred_check_branch
      %22 = sbr.rel (0) target = $region13
    $region12: #{tpu_custom_call.1} parent=1 // pred_region
      %s24 = ssub.s32 128, 128
      %25 = vsyncadd [#allocation4], %s24
      %s26 = sshll.u32 [#allocation3], 4
      %s27 = int_to_ptr.vmem [resolvable:$true] %s26
      %32 = dma.hbm_to_vmem [thread:$0]  %s2, 128, %s27, [#allocation4], 64, 64, 4
    $region13: #{tpu_custom_call.1} parent=1 // pred_fallthru
      _
    // Predicated region
    $region14: #{tpu_custom_call.1} parent=1 // pred_check
      _
    $region15: #{tpu_custom_call.1} parent=1 // pred_check_branch
      %34 = sbr.rel (0) target = $region17
    $region16: #{tpu_custom_call.1} parent=1 // pred_region
      _
    $region17: #{tpu_custom_call.1} parent=1 // pred_fallthru
      _
    // Predicated region
    $region18: #{tpu_custom_call.1} parent=1 // pred_check
      _
    $region19: #{tpu_custom_call.1} parent=1 // pred_check_branch
      %36 = sbr.rel (0) target = $region21
    $region20: #{tpu_custom_call.1} parent=1 // pred_region
      _
    $region21: #{tpu_custom_call.1} parent=1 // pred_fallthru
      _
    // Predicated region
    $region22: #{tpu_custom_call.1} parent=1 // pred_check
      _
    $region23: #{tpu_custom_call.1} parent=1 // pred_check_branch
      %38 = sbr.rel (0) target = $region25
    $region24: #{tpu_custom_call.1} parent=1 // pred_region
      %s40 = ssub.s32 16, 16
      %41 = vsyncadd [#allocation7], %s40
      %s43 = sshll.u32 [#allocation6], 4
      %s44 = int_to_ptr.vmem [resolvable:$true] %s43
      %46 = dma.hbm_to_vmem [thread:$0]  %s5, 16, %s44, [#allocation7]
    $region25: #{tpu_custom_call.1} parent=1 // pred_fallthru
      _
    // Predicated region
    $region26: #{tpu_custom_call.1} parent=1 // pred_check
      _
    $region27: #{tpu_custom_call.1} parent=1 // pred_check_branch
      %48 = sbr.rel (0) target = $region29
    $region28: #{tpu_custom_call.1} parent=1 // pred_region
      _
    $region29: #{tpu_custom_call.1} parent=1 // pred_fallthru
      _
    // Predicated region
    $region30: #{tpu_custom_call.1} parent=1 // pred_check
      _
    $region31: #{tpu_custom_call.1} parent=1 // pred_check_branch
      %50 = sbr.rel (0) target = $region33
    $region32: #{tpu_custom_call.1} parent=1 // pred_region
      _
    $region33: #{tpu_custom_call.1} parent=1 // pred_fallthru
      _
    // Predicated region
    $region34: #{tpu_custom_call.1} parent=1 // pred_check
      _
    $region35: #{tpu_custom_call.1} parent=1 // pred_check_branch
      %52 = sbr.rel (0) target = $region37
    $region36: #{tpu_custom_call.1} parent=1 // pred_region
      %53 = dma.done [#allocation4], 128
    $region37: #{tpu_custom_call.1} parent=1 // pred_fallthru
      _
    // Predicated region
    $region38: #{tpu_custom_call.1} parent=1 // pred_check
      _
    $region39: #{tpu_custom_call.1} parent=1 // pred_check_branch
      %55 = sbr.rel (0) target = $region41
    $region40: #{tpu_custom_call.1} parent=1 // pred_region
      %56 = dma.done [#allocation7], 16
    $region41: #{tpu_custom_call.1} parent=1 // pred_fallthru
      _
    %v58 = vld [vmem:[%s1] sm:$0xff]
    %v59 = vpack.c.bf16 %v58, %v58
    %v60 = vld [vmem:[#allocation3] sm:$0xf]
    %v61 = vld [vmem:[#allocation3 + $0x4] sm:$0xf]
    %v62 = vld [vmem:[%s3] sm:$0x1]
    %v64 = vlaneseq
    %v65 = vshrl.u32 %v64, 7
    %v66 = vsub.s32 0, %v65
    %v67 = vrot.slane %v62, %v66
    %v71 = vunpack.c.l.b16 %v60
    %v72 = vunpack.c.l.b16 %v61
    %v73 = vpack.c.b16 %v72, %v71
    %vm75 = vcmask 130048
    %v77 = vsel %vm75, %v59, 0
    %79 = vmatprep.subr.bf16.mxu0 0
    %80 = vmatpush1.bf16.msra.mxu0 0
    %81 = vmatprep.subr.bf16.mxu0 0
    %82 = vmatpush1.bf16.msra.mxu0 0
    %83 = vmatprep.subr.bf16.mxu0 0
    %84 = vmatpush1.bf16.msra.mxu0 0
    %85 = vmatprep.subr.bf16.mxu0 0
    %86 = vmatpush1.bf16.msra.mxu0 0
    %87 = vmatprep.subr.bf16.mxu0 0
    %88 = vmatpush1.bf16.msra.mxu0 0
    %89 = vmatprep.subr.bf16.mxu0 0
    %90 = vmatpush1.bf16.msra.mxu0 0
    %91 = vmatprep.subr.bf16.mxu0 0
    %92 = vmatpush1.bf16.msra.mxu0 0
    %93 = vmatprep.subr.bf16.mxu0 0
    %94 = vmatpush1.bf16.msra.mxu0 %v73
    %95 = vmatprep.subr.bf16.mxu0 0
    %96 = vmatpush2.bf16.msra.mxu0 0
    %97 = vmatprep.subr.bf16.mxu0 0
    %98 = vmatpush2.bf16.msra.mxu0 0
    %99 = vmatprep.subr.bf16.mxu0 0
    %100 = vmatpush2.bf16.msra.mxu0 0
    %101 = vmatprep.subr.bf16.mxu0 0
    %102 = vmatpush2.bf16.msra.mxu0 0
    %103 = vmatprep.subr.bf16.mxu0 0
    %104 = vmatpush2.bf16.msra.mxu0 0
    %105 = vmatprep.subr.bf16.mxu0 0
    %106 = vmatpush2.bf16.msra.mxu0 0
    %107 = vmatprep.subr.bf16.mxu0 0
    %108 = vmatpush2.bf16.msra.mxu0 0
    %109 = vmatprep.subr.bf16.mxu0 0
    %110 = vmatpush2.bf16.msra.mxu0 0
    %111 = vmatprep.mubr.bf16.mxu0 0
    %112 = vmatmul.mubr.bf16.gmra.mxu0 %v77
    %v113 = vpop.f32.mrf.mxu0
    %v114 = vadd.f32 %v67, %v113
    %v115 = vpop.f32.mrf.mxu0
    %v116 = vpop.f32.mrf.mxu0
    %v117 = vpop.f32.mrf.mxu0
    %118 = vdwg.mxu0
    %v119 = vmax.f32 %v114, 0.0
    %v120 = vpack.c.bf16 %v119, %v119
    %v121 = vld [vmem:[%s4] sm:$0xf]
    %v122 = vld [vmem:[%s4 + $0x4] sm:$0xf]
    %v123 = vld [vmem:[%s4 + $0x8] sm:$0xf]
    %v124 = vld [vmem:[%s4 + $0xc] sm:$0xf]
    %v125 = vld [vmem:[%s4 + $0x10] sm:$0xf]
    %v126 = vld [vmem:[%s4 + $0x14] sm:$0xf]
    %v127 = vld [vmem:[%s4 + $0x18] sm:$0xf]
    %v128 = vld [vmem:[%s4 + $0x1c] sm:$0xf]
    %v129 = vld [vmem:[%s4 + $0x20] sm:$0xf]
    %v130 = vld [vmem:[%s4 + $0x24] sm:$0xf]
    %v131 = vld [vmem:[%s4 + $0x28] sm:$0xf]
    %v132 = vld [vmem:[%s4 + $0x2c] sm:$0xf]
    %v133 = vld [vmem:[%s4 + $0x30] sm:$0xf]
    %v134 = vld [vmem:[%s4 + $0x34] sm:$0xf]
    %v135 = vld [vmem:[%s4 + $0x38] sm:$0xf]
    %v136 = vld [vmem:[%s4 + $0x3c] sm:$0xf]
    %v137 = vld [vmem:[#allocation6] sm:$0x1]
    %v139 = vlaneseq
    %v140 = vshrl.u32 %v139, 7
    %v141 = vsub.s32 0, %v140
    %v142 = vrot.slane %v137, %v141
    %v160 = vunpack.c.l.b16 %v121
    %v161 = vunpack.c.l.b16 %v122
    %v162 = vunpack.c.l.b16 %v123
    %v163 = vunpack.c.l.b16 %v124
    %v164 = vunpack.c.l.b16 %v125
    %v165 = vunpack.c.l.b16 %v126
    %v166 = vunpack.c.l.b16 %v127
    %v167 = vunpack.c.l.b16 %v128
    %v168 = vunpack.c.l.b16 %v129
    %v169 = vunpack.c.l.b16 %v130
    %v170 = vunpack.c.l.b16 %v131
    %v171 = vunpack.c.l.b16 %v132
    %v172 = vunpack.c.l.b16 %v133
    %v173 = vunpack.c.l.b16 %v134
    %v174 = vunpack.c.l.b16 %v135
    %v175 = vunpack.c.l.b16 %v136
    %v176 = vpack.c.b16 %v161, %v160
    %v177 = vpack.c.b16 %v163, %v162
    %v178 = vpack.c.b16 %v165, %v164
    %v179 = vpack.c.b16 %v167, %v166
    %v180 = vpack.c.b16 %v169, %v168
    %v181 = vpack.c.b16 %v171, %v170
    %v182 = vpack.c.b16 %v173, %v172
    %v183 = vpack.c.b16 %v175, %v174
    %192 = vmatprep.subr.bf16.mxu0 0
    %193 = vmatpush1.bf16.msra.mxu0 %v183
    %194 = vmatprep.subr.bf16.mxu0 0
    %195 = vmatpush1.bf16.msra.mxu0 %v182
    %196 = vmatprep.subr.bf16.mxu0 0
    %197 = vmatpush1.bf16.msra.mxu0 %v181
    %198 = vmatprep.subr.bf16.mxu0 0
    %199 = vmatpush1.bf16.msra.mxu0 %v180
    %200 = vmatprep.subr.bf16.mxu0 0
    %201 = vmatpush1.bf16.msra.mxu0 %v179
    %202 = vmatprep.subr.bf16.mxu0 0
    %203 = vmatpush1.bf16.msra.mxu0 %v178
    %204 = vmatprep.subr.bf16.mxu0 0
    %205 = vmatpush1.bf16.msra.mxu0 %v177
    %206 = vmatprep.subr.bf16.mxu0 0
    %207 = vmatpush1.bf16.msra.mxu0 %v176
    %208 = vmatprep.subr.bf16.mxu0 0
    %209 = vmatpush2.bf16.msra.mxu0 0
    %210 = vmatprep.subr.bf16.mxu0 0
    %211 = vmatpush2.bf16.msra.mxu0 0
    %212 = vmatprep.subr.bf16.mxu0 0
    %213 = vmatpush2.bf16.msra.mxu0 0
    %214 = vmatprep.subr.bf16.mxu0 0
    %215 = vmatpush2.bf16.msra.mxu0 0
    %216 = vmatprep.subr.bf16.mxu0 0
    %217 = vmatpush2.bf16.msra.mxu0 0
    %218 = vmatprep.subr.bf16.mxu0 0
    %219 = vmatpush2.bf16.msra.mxu0 0
    %220 = vmatprep.subr.bf16.mxu0 0
    %221 = vmatpush2.bf16.msra.mxu0 0
    %222 = vmatprep.subr.bf16.mxu0 0
    %223 = vmatpush2.bf16.msra.mxu0 0
    %224 = vmatprep.mubr.bf16.mxu0 0
    %225 = vmatmul.mubr.bf16.gmra.mxu0 %v120
    %v226 = vpop.f32.mrf.mxu0
    %v227 = vadd.f32 %v142, %v226
    %v228 = vpop.f32.mrf.mxu0
    %v229 = vpop.f32.mrf.mxu0
    %v230 = vpop.f32.mrf.mxu0
    %231 = vdwg.mxu0
    %v232 = vmax.f32 %v227, 0.0
    %v233 = vpack.c.bf16 %v232, %v232
    %v234 = vld [vmem:[%s6] sm:$0xf]
    %v235 = vld [vmem:[%s6 + $0x4] sm:$0xf]
    %v236 = vld [vmem:[%s6 + $0x8] sm:$0xf]
    %v237 = vld [vmem:[%s6 + $0xc] sm:$0xf]
    %v238 = vld [vmem:[%s6 + $0x10] sm:$0xf]
    %v239 = vld [vmem:[%s6 + $0x14] sm:$0xf]
    %v240 = vld [vmem:[%s6 + $0x18] sm:$0xf]
    %v241 = vld [vmem:[%s6 + $0x1c] sm:$0xf]
    %v242 = vld [vmem:[%s6 + $0x20] sm:$0xf]
    %v243 = vld [vmem:[%s6 + $0x24] sm:$0xf]
    %v244 = vld [vmem:[%s6 + $0x28] sm:$0xf]
    %v245 = vld [vmem:[%s6 + $0x2c] sm:$0xf]
    %v246 = vld [vmem:[%s6 + $0x30] sm:$0xf]
    %v247 = vld [vmem:[%s6 + $0x34] sm:$0xf]
    %v248 = vld [vmem:[%s6 + $0x38] sm:$0xf]
    %v249 = vld [vmem:[%s6 + $0x3c] sm:$0xf]
    %v250 = vld [vmem:[%s7] sm:$0x1]
    %v252 = vlaneseq
    %v253 = vshrl.u32 %v252, 7
    %v254 = vsub.s32 0, %v253
    %v255 = vrot.slane %v250, %v254
    %v273 = vunpack.c.l.b16 %v234
    %v274 = vunpack.c.l.b16 %v235
    %v275 = vunpack.c.l.b16 %v236
    %v276 = vunpack.c.l.b16 %v237
    %v277 = vunpack.c.l.b16 %v238
    %v278 = vunpack.c.l.b16 %v239
    %v279 = vunpack.c.l.b16 %v240
    %v280 = vunpack.c.l.b16 %v241
    %v281 = vunpack.c.l.b16 %v242
    %v282 = vunpack.c.l.b16 %v243
    %v283 = vunpack.c.l.b16 %v244
    %v284 = vunpack.c.l.b16 %v245
    %v285 = vunpack.c.l.b16 %v246
    %v286 = vunpack.c.l.b16 %v247
    %v287 = vunpack.c.l.b16 %v248
    %v288 = vunpack.c.l.b16 %v249
    %v289 = vpack.c.b16 %v274, %v273
    %v290 = vpack.c.b16 %v276, %v275
    %v291 = vpack.c.b16 %v278, %v277
    %v292 = vpack.c.b16 %v280, %v279
    %v293 = vpack.c.b16 %v282, %v281
    %v294 = vpack.c.b16 %v284, %v283
    %v295 = vpack.c.b16 %v286, %v285
    %v296 = vpack.c.b16 %v288, %v287
    %305 = vmatprep.subr.bf16.mxu0 0
    %306 = vmatpush1.bf16.msra.mxu0 %v296
    %307 = vmatprep.subr.bf16.mxu0 0
    %308 = vmatpush1.bf16.msra.mxu0 %v295
    %309 = vmatprep.subr.bf16.mxu0 0
    %310 = vmatpush1.bf16.msra.mxu0 %v294
    %311 = vmatprep.subr.bf16.mxu0 0
    %312 = vmatpush1.bf16.msra.mxu0 %v293
    %313 = vmatprep.subr.bf16.mxu0 0
    %314 = vmatpush1.bf16.msra.mxu0 %v292
    %315 = vmatprep.subr.bf16.mxu0 0
    %316 = vmatpush1.bf16.msra.mxu0 %v291
    %317 = vmatprep.subr.bf16.mxu0 0
    %318 = vmatpush1.bf16.msra.mxu0 %v290
    %319 = vmatprep.subr.bf16.mxu0 0
    %320 = vmatpush1.bf16.msra.mxu0 %v289
    %321 = vmatprep.subr.bf16.mxu0 0
    %322 = vmatpush2.bf16.msra.mxu0 0
    %323 = vmatprep.subr.bf16.mxu0 0
    %324 = vmatpush2.bf16.msra.mxu0 0
    %325 = vmatprep.subr.bf16.mxu0 0
    %326 = vmatpush2.bf16.msra.mxu0 0
    %327 = vmatprep.subr.bf16.mxu0 0
    %328 = vmatpush2.bf16.msra.mxu0 0
    %329 = vmatprep.subr.bf16.mxu0 0
    %330 = vmatpush2.bf16.msra.mxu0 0
    %331 = vmatprep.subr.bf16.mxu0 0
    %332 = vmatpush2.bf16.msra.mxu0 0
    %333 = vmatprep.subr.bf16.mxu0 0
    %334 = vmatpush2.bf16.msra.mxu0 0
    %335 = vmatprep.subr.bf16.mxu0 0
    %336 = vmatpush2.bf16.msra.mxu0 0
    %337 = vmatprep.mubr.bf16.mxu0 0
    %338 = vmatmul.mubr.bf16.gmra.mxu0 %v233
    %v339 = vpop.f32.mrf.mxu0
    %v340 = vadd.f32 %v255, %v339
    %v341 = vpop.f32.mrf.mxu0
    %v342 = vpop.f32.mrf.mxu0
    %v343 = vpop.f32.mrf.mxu0
    %344 = vdwg.mxu0
    %s345 = sld [smem:[#allocation2]]
    %v346 = vtanh.pop %v340
    %v347 = vstv %s345
    %v348 = vmul.f32 %v347, %v346
    %vm349 = vcmask 64512
    %350 = vst.msk [vmem:[#allocation8] sm:$0xff] %vm349, %v348
    // Predicated region
    $region42: #{tpu_custom_call.1} parent=1 // pred_check
      _
    $region43: #{tpu_custom_call.1} parent=1 // pred_check_branch
      %352 = sbr.rel (0) target = $region45
    $region44: #{tpu_custom_call.1} parent=1 // pred_region
      %s354 = ssub.s32 128, 128
      %355 = vsyncadd [#allocation5], %s354
      %s357 = sshll.u32 [#allocation8], 4
      %s358 = int_to_ptr.vmem [resolvable:$true] %s357
      %360 = dma.vmem_to_hbm [thread:$0]  %s358, 128, %s8, [#allocation5]
    $region45: #{tpu_custom_call.1} parent=1 // pred_fallthru
      _
    // Predicated region
    $region46: #{tpu_custom_call.1} parent=1 // pred_check
      _
    $region47: #{tpu_custom_call.1} parent=1 // pred_check_branch
      %362 = sbr.rel (0) target = $region49
    $region48: #{tpu_custom_call.1} parent=1 // pred_region
      %363 = dma.done [#allocation5], 128
    $region49: #{tpu_custom_call.1} parent=1 // pred_fallthru
      _
    %364 = vsyncpa [#allocation4], 1
    %365 = vsyncpa [#allocation7], 1
    %366 = vsyncpa [#allocation5], 1

// kernel: tpu_custom_call.1
$region0: #{tpu_custom_call.1}
  #allocation0 [shape = 'u32[]', space=smem, size = 0x4, offset = 0x4, fixed_abs, tag = 'smem constant byte address 0x4 - core index']
  #allocation1 [shape = 'u32[144,128]{1,0:T(1,128)}', space=vmem, size = 0x12000, scoped, tag = 'internal scratch']
  #allocation2 [shape = 'f32[1]{0:T(128)S(6)}', space=smem, size = 0x200, scoped, tag = 'scoped memory for tpu_custom_call.1']
  %s0 = inlined_call_operand.<no memory space> [shape: f32[1], index: 0, kind: input, shape index: {}]
  %s1 = inlined_call_operand.vmem [shape: f32[8,16], index: 1, kind: input, shape index: {}]
  %s2 = inlined_call_operand.hbm [shape: bf16[16,128], index: 2, kind: input, shape index: {}]
  %s3 = inlined_call_operand.vmem [shape: f32[1,128], index: 3, kind: input, shape index: {}]
  %s4 = inlined_call_operand.vmem [shape: bf16[128,128], index: 4, kind: input, shape index: {}]
  %s5 = inlined_call_operand.hbm [shape: f32[1,128], index: 5, kind: input, shape index: {}]
  %s6 = inlined_call_operand.vmem [shape: bf16[128,8], index: 6, kind: input, shape index: {}]
  %s7 = inlined_call_operand.vmem [shape: f32[1,8], index: 7, kind: input, shape index: {}]
  %s8 = inlined_call_operand.hbm [shape: f32[8,8], index: 8, kind: output, shape index: {}]
  %s9 = sld [smem:[#allocation0]]
  $region50: #{tpu_custom_call.1} parent=0
    _
  %s11 = ssub.s32 1, %s9
  %s12 = scalar_select 0, %s11, %s9
  %13 = sst [smem:[#allocation2]] %s0
  $region1: #{tpu_custom_call.1} parent=0
    #allocation3 [shape = 'u8[4096]{0}', space=vmem, size = 0x1000, scoped, tag = 'input window, operand 2, single buffered']
    #allocation4 [shape = 's32[1]{0}', space=sflag, size = 0x4, scoped, tag = 'scoped memory for tpu_custom_call.1']
    #allocation5 [shape = 's32[1]{0}', space=sflag, size = 0x4, scoped, tag = 'scoped memory for tpu_custom_call.1']
    #allocation6 [shape = 'u8[512]{0}', space=vmem, size = 0x400, scoped, tag = 'input window, operand 5, single buffered']
    #allocation7 [shape = 's32[1]{0}', space=sflag, size = 0x4, scoped, tag = 'scoped memory for tpu_custom_call.1']
    #allocation8 [shape = 'u8[4096]{0}', space=vmem, size = 0x1000, scoped, tag = 'output window, operand 0, single buffered']
    %14 = vsyncpa [#allocation4], 0
    %15 = vsyncpa [#allocation7], 0
    %16 = vsyncpa [#allocation5], 0
    // Predicated region
    $region2: #{tpu_custom_call.1} parent=1 // pred_check
      _
    $region3: #{tpu_custom_call.1} parent=1 // pred_check_branch
      %18 = sbr.rel (0) target = $region5
    $region4: #{tpu_custom_call.1} parent=1 // pred_region
      _
    $region5: #{tpu_custom_call.1} parent=1 // pred_fallthru
      _
    // Predicated region
    $region6: #{tpu_custom_call.1} parent=1 // pred_check
      _
    $region7: #{tpu_custom_call.1} parent=1 // pred_check_branch
      %20 = sbr.rel (0) target = $region9
    $region8: #{tpu_custom_call.1} parent=1 // pred_region
      _
    $region9: #{tpu_custom_call.1} parent=1 // pred_fallthru
      _
    // Predicated region
    $region10: #{tpu_custom_call.1} parent=1 // pred_check
      _
    $region11: #{tpu_custom_call.1} parent=1 // pred_check_branch
      %22 = sbr.rel (0) target = $region13
    $region12: #{tpu_custom_call.1} parent=1 // pred_region
      %s24 = ssub.s32 128, 128
      %25 = vsyncadd [#allocation4], %s24
      %s26 = sshll.u32 [#allocation3], 4
      %s27 = int_to_ptr.vmem [resolvable:$true] %s26
      %32 = dma.hbm_to_vmem [thread:$0]  %s2, 128, %s27, [#allocation4], 64, 64, 4
    $region13: #{tpu_custom_call.1} parent=1 // pred_fallthru
      _
    // Predicated region
    $region14: #{tpu_custom_call.1} parent=1 // pred_check
      _
    $region15: #{tpu_custom_call.1} parent=1 // pred_check_branch
      %34 = sbr.rel (0) target = $region17
    $region16: #{tpu_custom_call.1} parent=1 // pred_region
      _
    $region17: #{tpu_custom_call.1} parent=1 // pred_fallthru
      _
    // Predicated region
    $region18: #{tpu_custom_call.1} parent=1 // pred_check
      _
    $region19: #{tpu_custom_call.1} parent=1 // pred_check_branch
      %36 = sbr.rel (0) target = $region21
    $region20: #{tpu_custom_call.1} parent=1 // pred_region
      _
    $region21: #{tpu_custom_call.1} parent=1 // pred_fallthru
      _
    // Predicated region
    $region22: #{tpu_custom_call.1} parent=1 // pred_check
      _
    $region23: #{tpu_custom_call.1} parent=1 // pred_check_branch
      %38 = sbr.rel (0) target = $region25
    $region24: #{tpu_custom_call.1} parent=1 // pred_region
      %s40 = ssub.s32 16, 16
      %41 = vsyncadd [#allocation7], %s40
      %s43 = sshll.u32 [#allocation6], 4
      %s44 = int_to_ptr.vmem [resolvable:$true] %s43
      %46 = dma.hbm_to_vmem [thread:$0]  %s5, 16, %s44, [#allocation7]
    $region25: #{tpu_custom_call.1} parent=1 // pred_fallthru
      _
    // Predicated region
    $region26: #{tpu_custom_call.1} parent=1 // pred_check
      _
    $region27: #{tpu_custom_call.1} parent=1 // pred_check_branch
      %48 = sbr.rel (0) target = $region29
    $region28: #{tpu_custom_call.1} parent=1 // pred_region
      _
    $region29: #{tpu_custom_call.1} parent=1 // pred_fallthru
      _
    // Predicated region
    $region30: #{tpu_custom_call.1} parent=1 // pred_check
      _
    $region31: #{tpu_custom_call.1} parent=1 // pred_check_branch
      %50 = sbr.rel (0) target = $region33
    $region32: #{tpu_custom_call.1} parent=1 // pred_region
      _
    $region33: #{tpu_custom_call.1} parent=1 // pred_fallthru
      _
    // Predicated region
    $region34: #{tpu_custom_call.1} parent=1 // pred_check
      _
    $region35: #{tpu_custom_call.1} parent=1 // pred_check_branch
      %52 = sbr.rel (0) target = $region37
    $region36: #{tpu_custom_call.1} parent=1 // pred_region
      %53 = dma.done [#allocation4], 128
    $region37: #{tpu_custom_call.1} parent=1 // pred_fallthru
      _
    // Predicated region
    $region38: #{tpu_custom_call.1} parent=1 // pred_check
      _
    $region39: #{tpu_custom_call.1} parent=1 // pred_check_branch
      %55 = sbr.rel (0) target = $region41
    $region40: #{tpu_custom_call.1} parent=1 // pred_region
      %56 = dma.done [#allocation7], 16
    $region41: #{tpu_custom_call.1} parent=1 // pred_fallthru
      _
    %v58 = vld [vmem:[%s1] sm:$0xff]
    %v59 = vpack.c.bf16 %v58, %v58
    %v60 = vld [vmem:[#allocation3] sm:$0xf]
    %v61 = vld [vmem:[#allocation3 + $0x4] sm:$0xf]
    %v62 = vld [vmem:[%s3] sm:$0x1]
    %v64 = vlaneseq
    %v65 = vshrl.u32 %v64, 7
    %v66 = vsub.s32 0, %v65
    %v67 = vrot.slane %v62, %v66
    %v71 = vunpack.c.l.b16 %v60
    %v72 = vunpack.c.l.b16 %v61
    %v73 = vpack.c.b16 %v72, %v71
    %vm75 = vcmask 130048
    %v77 = vsel %vm75, %v59, 0
    %79 = vmatprep.subr.bf16.mxu0 0
    %80 = vmatpush1.bf16.msra.mxu0 0
    %81 = vmatprep.subr.bf16.mxu0 0
    %82 = vmatpush1.bf16.msra.mxu0 0
    %83 = vmatprep.subr.bf16.mxu0 0
    %84 = vmatpush1.bf16.msra.mxu0 0
    %85 = vmatprep.subr.bf16.mxu0 0
    %86 = vmatpush1.bf16.msra.mxu0 0
    %87 = vmatprep.subr.bf16.mxu0 0
    %88 = vmatpush1.bf16.msra.mxu0 0
    %89 = vmatprep.subr.bf16.mxu0 0
    %90 = vmatpush1.bf16.msra.mxu0 0
    %91 = vmatprep.subr.bf16.mxu0 0
    %92 = vmatpush1.bf16.msra.mxu0 0
    %93 = vmatprep.subr.bf16.mxu0 0
    %94 = vmatpush1.bf16.msra.mxu0 %v73
    %95 = vmatprep.subr.bf16.mxu0 0
    %96 = vmatpush2.bf16.msra.mxu0 0
    %97 = vmatprep.subr.bf16.mxu0 0
    %98 = vmatpush2.bf16.msra.mxu0 0
    %99 = vmatprep.subr.bf16.mxu0 0
    %100 = vmatpush2.bf16.msra.mxu0 0
    %101 = vmatprep.subr.bf16.mxu0 0
    %102 = vmatpush2.bf16.msra.mxu0 0
    %103 = vmatprep.subr.bf16.mxu0 0
    %104 = vmatpush2.bf16.msra.mxu0 0
    %105 = vmatprep.subr.bf16.mxu0 0
    %106 = vmatpush2.bf16.msra.mxu0 0
    %107 = vmatprep.subr.bf16.mxu0 0
    %108 = vmatpush2.bf16.msra.mxu0 0
    %109 = vmatprep.subr.bf16.mxu0 0
    %110 = vmatpush2.bf16.msra.mxu0 0
    %111 = vmatprep.mubr.bf16.mxu0 0
    %112 = vmatmul.mubr.bf16.gmra.mxu0 %v77
    %v113 = vpop.f32.mrf.mxu0
    %v114 = vadd.f32 %v67, %v113
    %v115 = vpop.f32.mrf.mxu0
    %v116 = vpop.f32.mrf.mxu0
    %v117 = vpop.f32.mrf.mxu0
    %118 = vdwg.mxu0
    %v119 = vmax.f32 %v114, 0.0
    %v120 = vpack.c.bf16 %v119, %v119
    %v121 = vld [vmem:[%s4] sm:$0xf]
    %v122 = vld [vmem:[%s4 + $0x4] sm:$0xf]
    %v123 = vld [vmem:[%s4 + $0x8] sm:$0xf]
    %v124 = vld [vmem:[%s4 + $0xc] sm:$0xf]
    %v125 = vld [vmem:[%s4 + $0x10] sm:$0xf]
    %v126 = vld [vmem:[%s4 + $0x14] sm:$0xf]
    %v127 = vld [vmem:[%s4 + $0x18] sm:$0xf]
    %v128 = vld [vmem:[%s4 + $0x1c] sm:$0xf]
    %v129 = vld [vmem:[%s4 + $0x20] sm:$0xf]
    %v130 = vld [vmem:[%s4 + $0x24] sm:$0xf]
    %v131 = vld [vmem:[%s4 + $0x28] sm:$0xf]
    %v132 = vld [vmem:[%s4 + $0x2c] sm:$0xf]
    %v133 = vld [vmem:[%s4 + $0x30] sm:$0xf]
    %v134 = vld [vmem:[%s4 + $0x34] sm:$0xf]
    %v135 = vld [vmem:[%s4 + $0x38] sm:$0xf]
    %v136 = vld [vmem:[%s4 + $0x3c] sm:$0xf]
    %v137 = vld [vmem:[#allocation6] sm:$0x1]
    %v139 = vlaneseq
    %v140 = vshrl.u32 %v139, 7
    %v141 = vsub.s32 0, %v140
    %v142 = vrot.slane %v137, %v141
    %v160 = vunpack.c.l.b16 %v121
    %v161 = vunpack.c.l.b16 %v122
    %v162 = vunpack.c.l.b16 %v123
    %v163 = vunpack.c.l.b16 %v124
    %v164 = vunpack.c.l.b16 %v125
    %v165 = vunpack.c.l.b16 %v126
    %v166 = vunpack.c.l.b16 %v127
    %v167 = vunpack.c.l.b16 %v128
    %v168 = vunpack.c.l.b16 %v129
    %v169 = vunpack.c.l.b16 %v130
    %v170 = vunpack.c.l.b16 %v131
    %v171 = vunpack.c.l.b16 %v132
    %v172 = vunpack.c.l.b16 %v133
    %v173 = vunpack.c.l.b16 %v134
    %v174 = vunpack.c.l.b16 %v135
    %v175 = vunpack.c.l.b16 %v136
    %v176 = vpack.c.b16 %v161, %v160
    %v177 = vpack.c.b16 %v163, %v162
    %v178 = vpack.c.b16 %v165, %v164
    %v179 = vpack.c.b16 %v167, %v166
    %v180 = vpack.c.b16 %v169, %v168
    %v181 = vpack.c.b16 %v171, %v170
    %v182 = vpack.c.b16 %v173, %v172
    %v183 = vpack.c.b16 %v175, %v174
    %192 = vmatprep.subr.bf16.mxu0 0
    %193 = vmatpush1.bf16.msra.mxu0 %v183
    %194 = vmatprep.subr.bf16.mxu0 0
    %195 = vmatpush1.bf16.msra.mxu0 %v182
    %196 = vmatprep.subr.bf16.mxu0 0
    %197 = vmatpush1.bf16.msra.mxu0 %v181
    %198 = vmatprep.subr.bf16.mxu0 0
    %199 = vmatpush1.bf16.msra.mxu0 %v180
    %200 = vmatprep.subr.bf16.mxu0 0
    %201 = vmatpush1.bf16.msra.mxu0 %v179
    %202 = vmatprep.subr.bf16.mxu0 0
    %203 = vmatpush1.bf16.msra.mxu0 %v178
    %204 = vmatprep.subr.bf16.mxu0 0
    %205 = vmatpush1.bf16.msra.mxu0 %v177
    %206 = vmatprep.subr.bf16.mxu0 0
    %207 = vmatpush1.bf16.msra.mxu0 %v176
    %208 = vmatprep.subr.bf16.mxu0 0
    %209 = vmatpush2.bf16.msra.mxu0 0
    %210 = vmatprep.subr.bf16.mxu0 0
    %211 = vmatpush2.bf16.msra.mxu0 0
    %212 = vmatprep.subr.bf16.mxu0 0
    %213 = vmatpush2.bf16.msra.mxu0 0
    %214 = vmatprep.subr.bf16.mxu0 0
    %215 = vmatpush2.bf16.msra.mxu0 0
    %216 = vmatprep.subr.bf16.mxu0 0
    %217 = vmatpush2.bf16.msra.mxu0 0
    %218 = vmatprep.subr.bf16.mxu0 0
    %219 = vmatpush2.bf16.msra.mxu0 0
    %220 = vmatprep.subr.bf16.mxu0 0
    %221 = vmatpush2.bf16.msra.mxu0 0
    %222 = vmatprep.subr.bf16.mxu0 0
    %223 = vmatpush2.bf16.msra.mxu0 0
    %224 = vmatprep.mubr.bf16.mxu0 0
    %225 = vmatmul.mubr.bf16.gmra.mxu0 %v120
    %v226 = vpop.f32.mrf.mxu0
    %v227 = vadd.f32 %v142, %v226
    %v228 = vpop.f32.mrf.mxu0
    %v229 = vpop.f32.mrf.mxu0
    %v230 = vpop.f32.mrf.mxu0
    %231 = vdwg.mxu0
    %v232 = vmax.f32 %v227, 0.0
    %v233 = vpack.c.bf16 %v232, %v232
    %v234 = vld [vmem:[%s6] sm:$0xf]
    %v235 = vld [vmem:[%s6 + $0x4] sm:$0xf]
    %v236 = vld [vmem:[%s6 + $0x8] sm:$0xf]
    %v237 = vld [vmem:[%s6 + $0xc] sm:$0xf]
    %v238 = vld [vmem:[%s6 + $0x10] sm:$0xf]
    %v239 = vld [vmem:[%s6 + $0x14] sm:$0xf]
    %v240 = vld [vmem:[%s6 + $0x18] sm:$0xf]
    %v241 = vld [vmem:[%s6 + $0x1c] sm:$0xf]
    %v242 = vld [vmem:[%s6 + $0x20] sm:$0xf]
    %v243 = vld [vmem:[%s6 + $0x24] sm:$0xf]
    %v244 = vld [vmem:[%s6 + $0x28] sm:$0xf]
    %v245 = vld [vmem:[%s6 + $0x2c] sm:$0xf]
    %v246 = vld [vmem:[%s6 + $0x30] sm:$0xf]
    %v247 = vld [vmem:[%s6 + $0x34] sm:$0xf]
    %v248 = vld [vmem:[%s6 + $0x38] sm:$0xf]
    %v249 = vld [vmem:[%s6 + $0x3c] sm:$0xf]
    %v250 = vld [vmem:[%s7] sm:$0x1]
    %v252 = vlaneseq
    %v253 = vshrl.u32 %v252, 7
    %v254 = vsub.s32 0, %v253
    %v255 = vrot.slane %v250, %v254
    %v273 = vunpack.c.l.b16 %v234
    %v274 = vunpack.c.l.b16 %v235
    %v275 = vunpack.c.l.b16 %v236
    %v276 = vunpack.c.l.b16 %v237
    %v277 = vunpack.c.l.b16 %v238
    %v278 = vunpack.c.l.b16 %v239
    %v279 = vunpack.c.l.b16 %v240
    %v280 = vunpack.c.l.b16 %v241
    %v281 = vunpack.c.l.b16 %v242
    %v282 = vunpack.c.l.b16 %v243
    %v283 = vunpack.c.l.b16 %v244
    %v284 = vunpack.c.l.b16 %v245
    %v285 = vunpack.c.l.b16 %v246
    %v286 = vunpack.c.l.b16 %v247
    %v287 = vunpack.c.l.b16 %v248
    %v288 = vunpack.c.l.b16 %v249
    %v289 = vpack.c.b16 %v274, %v273
    %v290 = vpack.c.b16 %v276, %v275
    %v291 = vpack.c.b16 %v278, %v277
    %v292 = vpack.c.b16 %v280, %v279
    %v293 = vpack.c.b16 %v282, %v281
    %v294 = vpack.c.b16 %v284, %v283
    %v295 = vpack.c.b16 %v286, %v285
    %v296 = vpack.c.b16 %v288, %v287
    %305 = vmatprep.subr.bf16.mxu0 0
    %306 = vmatpush1.bf16.msra.mxu0 %v296
    %307 = vmatprep.subr.bf16.mxu0 0
    %308 = vmatpush1.bf16.msra.mxu0 %v295
    %309 = vmatprep.subr.bf16.mxu0 0
    %310 = vmatpush1.bf16.msra.mxu0 %v294
    %311 = vmatprep.subr.bf16.mxu0 0
    %312 = vmatpush1.bf16.msra.mxu0 %v293
    %313 = vmatprep.subr.bf16.mxu0 0
    %314 = vmatpush1.bf16.msra.mxu0 %v292
    %315 = vmatprep.subr.bf16.mxu0 0
    %316 = vmatpush1.bf16.msra.mxu0 %v291
    %317 = vmatprep.subr.bf16.mxu0 0
    %318 = vmatpush1.bf16.msra.mxu0 %v290
    %319 = vmatprep.subr.bf16.mxu0 0
    %320 = vmatpush1.bf16.msra.mxu0 %v289
    %321 = vmatprep.subr.bf16.mxu0 0
    %322 = vmatpush2.bf16.msra.mxu0 0
    %323 = vmatprep.subr.bf16.mxu0 0
    %324 = vmatpush2.bf16.msra.mxu0 0
    %325 = vmatprep.subr.bf16.mxu0 0
    %326 = vmatpush2.bf16.msra.mxu0 0
    %327 = vmatprep.subr.bf16.mxu0 0
    %328 = vmatpush2.bf16.msra.mxu0 0
    %329 = vmatprep.subr.bf16.mxu0 0
    %330 = vmatpush2.bf16.msra.mxu0 0
    %331 = vmatprep.subr.bf16.mxu0 0
    %332 = vmatpush2.bf16.msra.mxu0 0
    %333 = vmatprep.subr.bf16.mxu0 0
    %334 = vmatpush2.bf16.msra.mxu0 0
    %335 = vmatprep.subr.bf16.mxu0 0
    %336 = vmatpush2.bf16.msra.mxu0 0
    %337 = vmatprep.mubr.bf16.mxu0 0
    %338 = vmatmul.mubr.bf16.gmra.mxu0 %v233
    %v339 = vpop.f32.mrf.mxu0
    %v340 = vadd.f32 %v255, %v339
    %v341 = vpop.f32.mrf.mxu0
    %v342 = vpop.f32.mrf.mxu0
    %v343 = vpop.f32.mrf.mxu0
    %344 = vdwg.mxu0
    %s345 = sld [smem:[#allocation2]]
    %v346 = vtanh.pop %v340
    %v347 = vstv %s345
    %v348 = vmul.f32 %v347, %v346
    %vm349 = vcmask 64512
    %350 = vst.msk [vmem:[#allocation8] sm:$0xff] %vm349, %v348
    // Predicated region
    $region42: #{tpu_custom_call.1} parent=1 // pred_check
      _
    $region43: #{tpu_custom_call.1} parent=1 // pred_check_branch
      %352 = sbr.rel (0) target = $region45
    $region44: #{tpu_custom_call.1} parent=1 // pred_region
      %s354 = ssub.s32 128, 128
      %355 = vsyncadd [#allocation5], %s354
      %s357 = sshll.u32 [#allocation8], 4
      %s358 = int_to_ptr.vmem [resolvable:$true] %s357
      %360 = dma.vmem_to_hbm [thread:$0]  %s358, 128, %s8, [#allocation5]
    $region45: #{tpu_custom_call.1} parent=1 // pred_fallthru
      _
    // Predicated region
    $region46: #{tpu_custom_call.1} parent=1 // pred_check
      _
    $region47: #{tpu_custom_call.1} parent=1 // pred_check_branch
      %362 = sbr.rel (0) target = $region49
    $region48: #{tpu_custom_call.1} parent=1 // pred_region
      %363 = dma.done [#allocation5], 128
    $region49: #{tpu_custom_call.1} parent=1 // pred_fallthru
      _
    %364 = vsyncpa [#allocation4], 1
    %365 = vsyncpa [#allocation7], 1
    %366 = vsyncpa [#allocation5], 1

</llo_original>
